<compile_context>
chip_gen: v5e
topology: v5e:2x2
jax: 0.10.0
libtpu: 0.0.40
codegen_flags: <defaults>
</compile_context>

<pallas_src>
import functools

import jax
import jax.numpy as jnp
from jax.experimental import pallas as pl
from jax.experimental.pallas import tpu as pltpu

_EPS = 1e-5
_COMPILER_PARAMS = pltpu.CompilerParams(
    dimension_semantics=("parallel",),   # batch grid: megacore / 2-TC sharding
)


# ---------------------------------------------------------------------------
# Fused kernel: [conv(1,3) s(1,2) + bias + ReLU + LN] -> [conv(3,1) s(2,1)
# + bias + ReLU + LN], one batch sample per grid step, all in VMEM.
# ---------------------------------------------------------------------------
def _sc_fused_kernel(x_ref, w1_ref, b1_ref, g1_ref, be1_ref,
                     w2_ref, b2_ref, g2_ref, be2_ref, out_ref,
                     *, c_in, c_out, h, out_w, out_h):
    """x_ref  : [H, (W+2)//2, 2*C_in]  W-padded input, stride-2 phase folded into channels
       w1_ref : [3*C_in, C_out]        tap-major packed weights (K, N)
       w2_ref : [3*C_out, C_out]
       b*_ref : [1, C_out]
       g*_ref / be*_ref : [M, C_out]   LN gamma/beta pre-permuted to channels-last
       out_ref: [out_H*out_W, C_out]   channels-last output of this sample
    """
    x = x_ref[...]                                        # f32

    # ---- stage 1: 1x3 conv, stride 2 along W (left zero-pad already applied) ----
    # folded column j holds [x_pad[2j, :], x_pad[2j+1, :]]  -> taps 0 and 1;
    # tap 2 (= x_pad[2j+2, :]) is the even-phase half of column j+1.
    m1 = h * out_w
    taps01 = x[:, 0:out_w, :].reshape(m1, 2 * c_in)
    tap2 = x[:, 1:out_w + 1, 0:c_in].reshape(m1, c_in)
    lhs1 = jnp.concatenate([taps01, tap2], axis=1)        # [M1, 3*C_in]
    y = jnp.dot(lhs1, w1_ref[...], preferred_element_type=jnp.float32)
    y = jnp.maximum(y + b1_ref[...], 0.0)                 # bias + ReLU

    # LayerNorm over the whole sample (C,H,out_W) — single-pass statistics.
    n1 = float(m1 * c_out)
    mean1 = jnp.sum(y) / n1
    var1 = jnp.sum(y * y) / n1 - mean1 * mean1
    y = (y - mean1) * jax.lax.rsqrt(var1 + _EPS) * g1_ref[...] + be1_ref[...]

    # ---- stage 2: 3x1 conv, stride 2 along H (top zero-pad built in-register) ----
    m2 = out_h * out_w
    y4 = y.reshape(out_h, 2, out_w, c_out)                # even/odd H-row phases
    ye = y4[:, 0:1, :, :].reshape(m2, c_out)              # rows 0,2,4,... -> tap 1
    yo = y4[:, 1:2, :, :].reshape(m2, c_out)              # rows 1,3,5,... -> tap 2
    tap0 = jnp.concatenate(                               # rows -1,1,3,... (-1 = zero pad)
        [jnp.zeros((out_w, c_out), y.dtype), yo[:(out_h - 1) * out_w, :]], axis=0)
    lhs2 = jnp.concatenate([tap0, ye, yo], axis=1)        # [M2, 3*C_out]
    z = jnp.dot(lhs2, w2_ref[...], preferred_element_type=jnp.float32)
    z = jnp.maximum(z + b2_ref[...], 0.0)

    n2 = float(m2 * c_out)
    mean2 = jnp.sum(z) / n2
    var2 = jnp.sum(z * z) / n2 - mean2 * mean2
    out_ref[...] = ((z - mean2) * jax.lax.rsqrt(var2 + _EPS)
                    * g2_ref[...] + be2_ref[...]).astype(out_ref.dtype)


# ---------------------------------------------------------------------------
# SC forward (NCHW at the boundary like PyTorch, channels-last internally)
# ---------------------------------------------------------------------------
def sc_forward(x_nchw, params):
    B, c_in, H, W = x_nchw.shape
    assert H % 2 == 0 and W % 2 == 0, "fingerprinter SC config expects even H, W"
    out_w = (W + 2 - 3) // 2 + 1
    out_h = (H + 2 - 3) // 2 + 1
    c_out = params["w1"].shape[-1]
    m1, m2 = H * out_w, out_h * out_w
    wp2 = (W + 2) // 2

    x = jnp.transpose(x_nchw, (0, 2, 3, 1))                  # NHWC
    xp = jnp.pad(x, ((0, 0), (0, 0), (1, 1), (0, 0)))        # pad W -> W+2
    xf = xp.reshape(B, H, wp2, 2 * c_in)                     # free phase-fold view

    kernel = functools.partial(_sc_fused_kernel, c_in=c_in, c_out=c_out,
                               h=H, out_w=out_w, out_h=out_h)
    z = pl.pallas_call(
        kernel,
        grid=(B,),
        in_specs=[
            pl.BlockSpec((None, H, wp2, 2 * c_in), lambda b: (b, 0, 0, 0)),
            pl.BlockSpec((3 * c_in, c_out), lambda b: (0, 0)),
            pl.BlockSpec((1, c_out), lambda b: (0, 0)),
            pl.BlockSpec((m1, c_out), lambda b: (0, 0)),
            pl.BlockSpec((m1, c_out), lambda b: (0, 0)),
            pl.BlockSpec((3 * c_out, c_out), lambda b: (0, 0)),
            pl.BlockSpec((1, c_out), lambda b: (0, 0)),
            pl.BlockSpec((m2, c_out), lambda b: (0, 0)),
            pl.BlockSpec((m2, c_out), lambda b: (0, 0)),
        ],
        out_specs=pl.BlockSpec((None, m2, c_out), lambda b: (b, 0, 0)),
        out_shape=jax.ShapeDtypeStruct((B, m2, c_out), jnp.float32),
        compiler_params=_COMPILER_PARAMS,
    )(xf, params["w1"], params["b1"], params["g1"], params["be1"],
      params["w2"], params["b2"], params["g2"], params["be2"])

    z = z.reshape(B, out_h, out_w, c_out)
    return jnp.transpose(z, (0, 3, 1, 2))                    # NCHW like PyTorch


# ---------------------------------------------------------------------------
# Parameters: raw PyTorch layout -> packed kernel layout (done once, at init)
# ---------------------------------------------------------------------------
def init_raw_params(key, in_channels, out_channels, H, W):
    out_w = (W + 2 - 3) // 2 + 1
    out_h = (H + 2 - 3) // 2 + 1
    ks = jax.random.split(key, 8)
    s1 = 1.0 / jnp.sqrt(in_channels * 3.0)
    s2 = 1.0 / jnp.sqrt(out_channels * 3.0)
    return dict(
        w1=jax.random.normal(ks[0], (out_channels, in_channels, 1, 3), jnp.float32) * s1,
        b1=0.01 * jax.random.normal(ks[1], (out_channels,), jnp.float32),
        g1=1.0 + 0.01 * jax.random.normal(ks[2], (out_channels, H, out_w), jnp.float32),
        be1=0.01 * jax.random.normal(ks[3], (out_channels, H, out_w), jnp.float32),
        w2=jax.random.normal(ks[4], (out_channels, out_channels, 3, 1), jnp.float32) * s2,
        b2=0.01 * jax.random.normal(ks[5], (out_channels,), jnp.float32),
        g2=1.0 + 0.01 * jax.random.normal(ks[6], (out_channels, out_h, out_w), jnp.float32),
        be2=0.01 * jax.random.normal(ks[7], (out_channels, out_h, out_w), jnp.float32),
    )


def prepare_params(raw):
    def pack_w(w):   # [C_out, C_in, kh, kw] (kh or kw == 1) -> [3*C_in, C_out], tap-major
        c_out, c_in = w.shape[0], w.shape[1]
        w = w.reshape(c_out, c_in, 3)
        return jnp.transpose(w, (2, 1, 0)).reshape(3 * c_in, c_out)

    def pack_ln(g):  # [C_out, Hd, Wd] -> [Hd*Wd, C_out] (channels-last layout)
        return jnp.transpose(g, (1, 2, 0)).reshape(-1, g.shape[0])

    return dict(
        w1=pack_w(raw["w1"]), b1=raw["b1"].reshape(1, -1),
        g1=pack_ln(raw["g1"]), be1=pack_ln(raw["be1"]),
        w2=pack_w(raw["w2"]), b2=raw["b2"].reshape(1, -1),
        g2=pack_ln(raw["g2"]), be2=pack_ln(raw["be2"]),
    )


# ---------------------------------------------------------------------------
# Plain-JAX reference (numerical sanity check of the fused layout math)
# ---------------------------------------------------------------------------
def sc_reference(x, raw):
    def ln(y, g, b):
        mean = jnp.mean(y, axis=(1, 2, 3), keepdims=True)
        var = jnp.mean((y - mean) ** 2, axis=(1, 2, 3), keepdims=True)
        return (y - mean) * jax.lax.rsqrt(var + _EPS) * g[None] + b[None]

    y = jax.lax.conv_general_dilated(
        x, raw["w1"], window_strides=(1, 2), padding=((0, 0), (1, 1)),
        dimension_numbers=("NCHW", "OIHW", "NCHW"),
        precision=jax.lax.Precision.HIGHEST)
    y = jnp.maximum(y + raw["b1"][None, :, None, None], 0.0)
    y = ln(y, raw["g1"], raw["be1"])
    z = jax.lax.conv_general_dilated(
        y, raw["w2"], window_strides=(2, 1), padding=((1, 1), (0, 0)),
        dimension_numbers=("NCHW", "OIHW", "NCHW"),
        precision=jax.lax.Precision.HIGHEST)
    z = jnp.maximum(z + raw["b2"][None, :, None, None], 0.0)
    return ln(z, raw["g2"], raw["be2"])


if __name__ == "__main__":
    key = jax.random.PRNGKey(0)
    kp, kx = jax.random.split(key)

    B, C_in, C_out, H, W = 2, 4, 32, 16, 16
    raw = init_raw_params(kp, C_in, C_out, H, W)
    params = prepare_params(raw)
    x = jax.random.normal(kx, (B, C_in, H, W), jnp.float32)

    fwd = jax.jit(sc_forward)
    out = jax.block_until_ready(fwd(x, params))

    assert out.shape == (B, C_out, H // 2, W // 2), out.shape
    assert bool(jnp.all(jnp.isfinite(out)))

    ref = sc_reference(x, raw)
    max_err = float(jnp.max(jnp.abs(out - ref)))
    assert max_err < 5e-2, max_err

    print("KERNEL_OK")
</pallas_src>

<mosaic_0001>
module attributes {stable_mosaic.version = 11 : i64} {
  func.func @_sc_fused_kernel(%arg0: i32, %arg1: memref<1x16x9x8xf32, #tpu.memory_space<vmem>>, %arg2: memref<12x32xf32, #tpu.memory_space<vmem>>, %arg3: memref<1x32xf32, #tpu.memory_space<vmem>>, %arg4: memref<128x32xf32, #tpu.memory_space<vmem>>, %arg5: memref<128x32xf32, #tpu.memory_space<vmem>>, %arg6: memref<96x32xf32, #tpu.memory_space<vmem>>, %arg7: memref<1x32xf32, #tpu.memory_space<vmem>>, %arg8: memref<64x32xf32, #tpu.memory_space<vmem>>, %arg9: memref<64x32xf32, #tpu.memory_space<vmem>>, %arg10: memref<1x64x32xf32, #tpu.memory_space<vmem>>) attributes {dimension_semantics = [#tpu.dimension_semantics<parallel>], iteration_bounds = array<i64: 2>, scalar_prefetch = 0 : i64, scratch_operands = 0 : i64, tpu.core_type = #tpu.core_type<tc>, window_params = [{transform_indices = @transform_0, window_bounds = array<i64: 1, 16, 9, 8>}, {pipeline_mode = #tpu.pipeline_mode<synchronous>, transform_indices = @transform_1, window_bounds = array<i64: 12, 32>}, {pipeline_mode = #tpu.pipeline_mode<synchronous>, transform_indices = @transform_2, window_bounds = array<i64: 1, 32>}, {pipeline_mode = #tpu.pipeline_mode<synchronous>, transform_indices = @transform_3, window_bounds = array<i64: 128, 32>}, {pipeline_mode = #tpu.pipeline_mode<synchronous>, transform_indices = @transform_4, window_bounds = array<i64: 128, 32>}, {pipeline_mode = #tpu.pipeline_mode<synchronous>, transform_indices = @transform_5, window_bounds = array<i64: 96, 32>}, {pipeline_mode = #tpu.pipeline_mode<synchronous>, transform_indices = @transform_6, window_bounds = array<i64: 1, 32>}, {pipeline_mode = #tpu.pipeline_mode<synchronous>, transform_indices = @transform_7, window_bounds = array<i64: 64, 32>}, {pipeline_mode = #tpu.pipeline_mode<synchronous>, transform_indices = @transform_8, window_bounds = array<i64: 64, 32>}, {transform_indices = @transform_9, window_bounds = array<i64: 1, 64, 32>}]} {
    %c0 = arith.constant 0 : index
    %c0_0 = arith.constant 0 : index
    %c0_1 = arith.constant 0 : index
    %c0_2 = arith.constant 0 : index
    %0 = vector.load %arg1[%c0, %c0_0, %c0_1, %c0_2] : memref<1x16x9x8xf32, #tpu.memory_space<vmem>>, vector<1x16x9x8xf32>
    %1 = vector.shape_cast %0 : vector<1x16x9x8xf32> to vector<16x9x8xf32>
    %2 = vector.extract_strided_slice %1 {offsets = [0, 0, 0], sizes = [16, 8, 8], strides = [1, 1, 1]} : vector<16x9x8xf32> to vector<16x8x8xf32>
    %3 = vector.shape_cast %2 : vector<16x8x8xf32> to vector<128x8xf32>
    %4 = vector.extract_strided_slice %1 {offsets = [0, 1, 0], sizes = [16, 8, 4], strides = [1, 1, 1]} : vector<16x9x8xf32> to vector<16x8x4xf32>
    %5 = vector.shape_cast %4 : vector<16x8x4xf32> to vector<128x4xf32>
    %6 = tpu.concatenate %3, %5 in 1 : vector<128x8xf32>, vector<128x4xf32> -> vector<128x12xf32>
    %c0_3 = arith.constant 0 : index
    %c0_4 = arith.constant 0 : index
    %7 = vector.load %arg2[%c0_3, %c0_4] : memref<12x32xf32, #tpu.memory_space<vmem>>, vector<12x32xf32>
    %cst = arith.constant dense<0.000000e+00> : vector<128x32xf32>
    %8 = tpu.matmul %6, %7, %cst {dimension_numbers = #tpu.dot_dimension_numbers<[1], [0], [0], [1], [0, 0, 1, 1], [], []>} : vector<128x12xf32>, vector<12x32xf32>, vector<128x32xf32> -> vector<128x32xf32>
    %c0_5 = arith.constant 0 : index
    %c0_6 = arith.constant 0 : index
    %9 = vector.load %arg3[%c0_5, %c0_6] : memref<1x32xf32, #tpu.memory_space<vmem>>, vector<1x32xf32>
    %10 = vector.broadcast %9 : vector<1x32xf32> to vector<128x32xf32>
    %11 = arith.addf %8, %10 : vector<128x32xf32>
    %cst_7 = arith.constant 0.000000e+00 : f32
    %12 = vector.broadcast %cst_7 : f32 to vector<128x32xf32>
    %13 = arith.maximumf %11, %12 : vector<128x32xf32>
    %14 = vector.shape_cast %13 : vector<128x32xf32> to vector<1x128x32xf32>
    %cst_8 = arith.constant dense<0.000000e+00> : vector<1xf32>
    %15 = vector.multi_reduction <add>, %14, %cst_8 [1, 2] : vector<1x128x32xf32> to vector<1xf32>
    %16 = vector.shape_cast %15 : vector<1xf32> to vector<1x1x1xf32>
    %17 = vector.extract %16[0, 0, 0] : f32 from vector<1x1x1xf32>
    %cst_9 = arith.constant 4.096000e+03 : f32
    %18 = arith.divf %17, %cst_9 : f32
    %19 = arith.mulf %13, %13 : vector<128x32xf32>
    %20 = vector.shape_cast %19 : vector<128x32xf32> to vector<1x128x32xf32>
    %cst_10 = arith.constant dense<0.000000e+00> : vector<1xf32>
    %21 = vector.multi_reduction <add>, %20, %cst_10 [1, 2] : vector<1x128x32xf32> to vector<1xf32>
    %22 = vector.shape_cast %21 : vector<1xf32> to vector<1x1x1xf32>
    %23 = vector.extract %22[0, 0, 0] : f32 from vector<1x1x1xf32>
    %cst_11 = arith.constant 4.096000e+03 : f32
    %24 = arith.divf %23, %cst_11 : f32
    %25 = arith.mulf %18, %18 : f32
    %26 = arith.subf %24, %25 : f32
    %27 = vector.broadcast %18 : f32 to vector<128x32xf32>
    %28 = arith.subf %13, %27 : vector<128x32xf32>
    %cst_12 = arith.constant 9.99999974E-6 : f32
    %29 = arith.addf %26, %cst_12 : f32
    %30 = math.rsqrt %29 : f32
    %31 = vector.broadcast %30 : f32 to vector<128x32xf32>
    %32 = arith.mulf %28, %31 : vector<128x32xf32>
    %c0_13 = arith.constant 0 : index
    %c0_14 = arith.constant 0 : index
    %33 = vector.load %arg4[%c0_13, %c0_14] : memref<128x32xf32, #tpu.memory_space<vmem>>, vector<128x32xf32>
    %34 = arith.mulf %32, %33 : vector<128x32xf32>
    %c0_15 = arith.constant 0 : index
    %c0_16 = arith.constant 0 : index
    %35 = vector.load %arg5[%c0_15, %c0_16] : memref<128x32xf32, #tpu.memory_space<vmem>>, vector<128x32xf32>
    %36 = arith.addf %34, %35 : vector<128x32xf32>
    %37 = vector.shape_cast %36 : vector<128x32xf32> to vector<8x2x8x32xf32>
    %38 = vector.extract_strided_slice %37 {offsets = [0, 0, 0, 0], sizes = [8, 1, 8, 32], strides = [1, 1, 1, 1]} : vector<8x2x8x32xf32> to vector<8x1x8x32xf32>
    %39 = vector.shape_cast %38 : vector<8x1x8x32xf32> to vector<64x32xf32>
    %40 = vector.extract_strided_slice %37 {offsets = [0, 1, 0, 0], sizes = [8, 1, 8, 32], strides = [1, 1, 1, 1]} : vector<8x2x8x32xf32> to vector<8x1x8x32xf32>
    %41 = vector.shape_cast %40 : vector<8x1x8x32xf32> to vector<64x32xf32>
    %cst_17 = arith.constant 0.000000e+00 : f32
    %42 = vector.broadcast %cst_17 : f32 to vector<8x32xf32>
    %43 = vector.extract_strided_slice %41 {offsets = [0, 0], sizes = [56, 32], strides = [1, 1]} : vector<64x32xf32> to vector<56x32xf32>
    %44 = tpu.concatenate %42, %43 in 0 : vector<8x32xf32>, vector<56x32xf32> -> vector<64x32xf32>
    %45 = tpu.concatenate %44, %39, %41 in 1 : vector<64x32xf32>, vector<64x32xf32>, vector<64x32xf32> -> vector<64x96xf32>
    %c0_18 = arith.constant 0 : index
    %c0_19 = arith.constant 0 : index
    %46 = vector.load %arg6[%c0_18, %c0_19] : memref<96x32xf32, #tpu.memory_space<vmem>>, vector<96x32xf32>
    %cst_20 = arith.constant dense<0.000000e+00> : vector<64x32xf32>
    %47 = tpu.matmul %45, %46, %cst_20 {dimension_numbers = #tpu.dot_dimension_numbers<[1], [0], [0], [1], [0, 0, 1, 1], [], []>} : vector<64x96xf32>, vector<96x32xf32>, vector<64x32xf32> -> vector<64x32xf32>
    %c0_21 = arith.constant 0 : index
    %c0_22 = arith.constant 0 : index
    %48 = vector.load %arg7[%c0_21, %c0_22] : memref<1x32xf32, #tpu.memory_space<vmem>>, vector<1x32xf32>
    %49 = vector.broadcast %48 : vector<1x32xf32> to vector<64x32xf32>
    %50 = arith.addf %47, %49 : vector<64x32xf32>
    %cst_23 = arith.constant 0.000000e+00 : f32
    %51 = vector.broadcast %cst_23 : f32 to vector<64x32xf32>
    %52 = arith.maximumf %50, %51 : vector<64x32xf32>
    %53 = vector.shape_cast %52 : vector<64x32xf32> to vector<1x64x32xf32>
    %cst_24 = arith.constant dense<0.000000e+00> : vector<1xf32>
    %54 = vector.multi_reduction <add>, %53, %cst_24 [1, 2] : vector<1x64x32xf32> to vector<1xf32>
    %55 = vector.shape_cast %54 : vector<1xf32> to vector<1x1x1xf32>
    %56 = vector.extract %55[0, 0, 0] : f32 from vector<1x1x1xf32>
    %cst_25 = arith.constant 2.048000e+03 : f32
    %57 = arith.divf %56, %cst_25 : f32
    %58 = arith.mulf %52, %52 : vector<64x32xf32>
    %59 = vector.shape_cast %58 : vector<64x32xf32> to vector<1x64x32xf32>
    %cst_26 = arith.constant dense<0.000000e+00> : vector<1xf32>
    %60 = vector.multi_reduction <add>, %59, %cst_26 [1, 2] : vector<1x64x32xf32> to vector<1xf32>
    %61 = vector.shape_cast %60 : vector<1xf32> to vector<1x1x1xf32>
    %62 = vector.extract %61[0, 0, 0] : f32 from vector<1x1x1xf32>
    %cst_27 = arith.constant 2.048000e+03 : f32
    %63 = arith.divf %62, %cst_27 : f32
    %64 = arith.mulf %57, %57 : f32
    %65 = arith.subf %63, %64 : f32
    %66 = vector.broadcast %57 : f32 to vector<64x32xf32>
    %67 = arith.subf %52, %66 : vector<64x32xf32>
    %cst_28 = arith.constant 9.99999974E-6 : f32
    %68 = arith.addf %65, %cst_28 : f32
    %69 = math.rsqrt %68 : f32
    %70 = vector.broadcast %69 : f32 to vector<64x32xf32>
    %71 = arith.mulf %67, %70 : vector<64x32xf32>
    %c0_29 = arith.constant 0 : index
    %c0_30 = arith.constant 0 : index
    %72 = vector.load %arg8[%c0_29, %c0_30] : memref<64x32xf32, #tpu.memory_space<vmem>>, vector<64x32xf32>
    %73 = arith.mulf %71, %72 : vector<64x32xf32>
    %c0_31 = arith.constant 0 : index
    %c0_32 = arith.constant 0 : index
    %74 = vector.load %arg9[%c0_31, %c0_32] : memref<64x32xf32, #tpu.memory_space<vmem>>, vector<64x32xf32>
    %75 = arith.addf %73, %74 : vector<64x32xf32>
    %c0_33 = arith.constant 0 : index
    %c0_34 = arith.constant 0 : index
    %c0_35 = arith.constant 0 : index
    %76 = vector.load %arg10[%c0_33, %c0_34, %c0_35] : memref<1x64x32xf32, #tpu.memory_space<vmem>>, vector<1x64x32xf32>
    %77 = vector.shape_cast %76 : vector<1x64x32xf32> to vector<64x32xf32>
    %78 = vector.shape_cast %75 : vector<64x32xf32> to vector<1x64x32xf32>
    tpu.vector_store %arg10[%c0_33, %c0_34, %c0_35], %78 {strides = array<i32>} : memref<1x64x32xf32, #tpu.memory_space<vmem>>, vector<1x64x32xf32>,
    return
  }
  func.func @transform_0(%arg0: i32) -> (i32, i32, i32, i32) {
    %c0_i32 = arith.constant 0 : i32
    %c0_i32_0 = arith.constant 0 : i32
    %c0_i32_1 = arith.constant 0 : i32
    %c0_i32_2 = arith.constant 0 : i32
    return %arg0, %c0_i32, %c0_i32_0, %c0_i32_1 : i32, i32, i32, i32
  }
  func.func @transform_1(%arg0: i32) -> (i32, i32) {
    %c0_i32 = arith.constant 0 : i32
    %c0_i32_0 = arith.constant 0 : i32
    %c0_i32_1 = arith.constant 0 : i32
    return %c0_i32, %c0_i32_0 : i32, i32
  }
  func.func @transform_2(%arg0: i32) -> (i32, i32) {
    %c0_i32 = arith.constant 0 : i32
    %c0_i32_0 = arith.constant 0 : i32
    %c0_i32_1 = arith.constant 0 : i32
    return %c0_i32, %c0_i32_0 : i32, i32
  }
  func.func @transform_3(%arg0: i32) -> (i32, i32) {
    %c0_i32 = arith.constant 0 : i32
    %c0_i32_0 = arith.constant 0 : i32
    %c0_i32_1 = arith.constant 0 : i32
    return %c0_i32, %c0_i32_0 : i32, i32
  }
  func.func @transform_4(%arg0: i32) -> (i32, i32) {
    %c0_i32 = arith.constant 0 : i32
    %c0_i32_0 = arith.constant 0 : i32
    %c0_i32_1 = arith.constant 0 : i32
    return %c0_i32, %c0_i32_0 : i32, i32
  }
  func.func @transform_5(%arg0: i32) -> (i32, i32) {
    %c0_i32 = arith.constant 0 : i32
    %c0_i32_0 = arith.constant 0 : i32
    %c0_i32_1 = arith.constant 0 : i32
    return %c0_i32, %c0_i32_0 : i32, i32
  }
  func.func @transform_6(%arg0: i32) -> (i32, i32) {
    %c0_i32 = arith.constant 0 : i32
    %c0_i32_0 = arith.constant 0 : i32
    %c0_i32_1 = arith.constant 0 : i32
    return %c0_i32, %c0_i32_0 : i32, i32
  }
  func.func @transform_7(%arg0: i32) -> (i32, i32) {
    %c0_i32 = arith.constant 0 : i32
    %c0_i32_0 = arith.constant 0 : i32
    %c0_i32_1 = arith.constant 0 : i32
    return %c0_i32, %c0_i32_0 : i32, i32
  }
  func.func @transform_8(%arg0: i32) -> (i32, i32) {
    %c0_i32 = arith.constant 0 : i32
    %c0_i32_0 = arith.constant 0 : i32
    %c0_i32_1 = arith.constant 0 : i32
    return %c0_i32, %c0_i32_0 : i32, i32
  }
  func.func @transform_9(%arg0: i32) -> (i32, i32, i32) {
    %c0_i32 = arith.constant 0 : i32
    %c0_i32_0 = arith.constant 0 : i32
    %c0_i32_1 = arith.constant 0 : i32
    return %arg0, %c0_i32, %c0_i32_0 : i32, i32, i32
  }
}

</mosaic_0001>

<llo_original>
// kernel: sc_forward.1
$region0: #{sc_forward.1}
  #allocation0 [shape = 'u32[]', space=smem, size = 0x4, offset = 0x4, fixed_abs, tag = 'smem constant byte address 0x4 - core index']
  #allocation1 [shape = 'u32[72,128]{1,0:T(1,128)}', space=vmem, size = 0x9000, scoped, tag = 'internal scratch']
  %s0 = inlined_call_operand.vmem [shape: f32[2,16,9,8], index: 0, kind: input, shape index: {}]
  %s1 = inlined_call_operand.vmem [shape: f32[12,32], index: 1, kind: input, shape index: {}]
  %s2 = inlined_call_operand.vmem [shape: f32[1,32], index: 2, kind: input, shape index: {}]
  %s3 = inlined_call_operand.vmem [shape: f32[128,32], index: 3, kind: input, shape index: {}]
  %s4 = inlined_call_operand.vmem [shape: f32[128,32], index: 4, kind: input, shape index: {}]
  %s5 = inlined_call_operand.vmem [shape: f32[96,32], index: 5, kind: input, shape index: {}]
  %s6 = inlined_call_operand.vmem [shape: f32[1,32], index: 6, kind: input, shape index: {}]
  %s7 = inlined_call_operand.vmem [shape: f32[64,32], index: 7, kind: input, shape index: {}]
  %s8 = inlined_call_operand.vmem [shape: f32[64,32], index: 8, kind: input, shape index: {}]
  %s9 = inlined_call_operand.hbm [shape: f32[2,64,32], index: 9, kind: output, shape index: {}]
  %s10 = sld [smem:[#allocation0]]
  $region69: #{sc_forward.1} parent=0
    _
  %s12 = ssub.s32 1, %s10
  %s13 = scalar_select 0, %s12, %s10
  $region1: #{sc_forward.1} parent=0
    #allocation2 [shape = 'u8[65536]{0}', space=vmem, size = 0x10000, scoped, tag = 'output window, operand 0']
    #allocation3 [shape = 's32[2]{0}', space=sflag, size = 0x8, scoped, tag = 'scoped memory for sc_forward.1']
    %14 = vsyncpa [#allocation3], 0
    %s15 = scalar_lea.sflag [#allocation3], 1
    %16 = vsyncpa %s15, 0
    loop: start=0, step=1, limit=4
    $region2: #{sc_forward.1} parent=1 // loop_pre_header
      _
    $region3: #{sc_forward.1} parent=1 // loop_header
      %s18 = sphi 0, %s22
      %p19 = scmp.ge.s32.totalorder %s18, 4
      %s28 = sphi 0, %s30
      %s31 = sphi 0, %s28
      %s32 = sphi 0, %s31
      %s48 = sphi 0, %s32
      %s52 = sphi 0, %s52
      %s54 = sphi 0, %s52
      %s55 = sphi 0, %s54
      %s69 = sphi 0, %s55
      %s73 = sphi 0, %s73
      %s75 = sphi 0, %s73
      %s76 = sphi 0, %s75
      %s90 = sphi 0, %s76
      %s94 = sphi 0, %s94
      %s96 = sphi 0, %s94
      %s97 = sphi 0, %s96
      %s111 = sphi 0, %s97
      %s115 = sphi 0, %s115
      %s117 = sphi 0, %s115
      %s118 = sphi 0, %s117
      %s132 = sphi 0, %s118
      %s136 = sphi 0, %s136
      %s138 = sphi 0, %s136
      %s139 = sphi 0, %s138
      %s153 = sphi 0, %s139
      %s157 = sphi 0, %s157
      %s159 = sphi 0, %s157
      %s160 = sphi 0, %s159
      %s174 = sphi 0, %s160
      %s178 = sphi 0, %s178
      %s180 = sphi 0, %s178
      %s181 = sphi 0, %s180
      %s195 = sphi 0, %s181
      %s199 = sphi 0, %s199
      %s201 = sphi 0, %s199
      %s202 = sphi 0, %s201
      %s216 = sphi 0, %s202
      %s222 = sphi 0, %s224
      %s225 = sphi 0, %s222
      %s226 = sphi 0, %s225
      %s242 = sphi 0, %s226
    $region4: #{sc_forward.1} parent=1 // loop_header_branch
      %21 = sbr.rel (%p19) target = $region8
    $region5: #{sc_forward.1} parent=1 // loop_body
      %s23 = ssub.s32 %s18, 1
      %s24 = ssub.s32 %s18, 2
      %s25 = sadd.s32 %s18, 1
      %s26 = ssub.s32 %s18, %s25
      %p27 = scmp.eq.s32.totalorder %s26, 0
      %s29 = sadd.s32 %s28, 1
      %s30 = scalar_select %p27, %s28, %s29
      %p33 = pneg %p27
      %p34 = scmp.eq.s32.totalorder %s18, 1
      %p35 = por %p33, %p34
      %p36 = scmp.ne.s32.totalorder %s28, %s31
      %p37 = scmp.eq.s32.totalorder %s18, 0
      %p38 = por %p36, %p37
      %p39 = scmp.ne.s32.totalorder %s28, %s31
      %p40 = scmp.eq.s32.totalorder %s23, 1
      %p41 = por %p39, %p40
      %p42 = scmp.ne.s32.totalorder %s31, %s32
      %p43 = scmp.eq.s32.totalorder %s23, 0
      %p44 = por %p42, %p43
      %p45 = scmp.ne.s32.totalorder %s31, %s32
      %p46 = scmp.eq.s32.totalorder %s24, 1
      %p47 = por %p45, %p46
      %p49 = scmp.ne.s32.totalorder %s32, %s48
      %p50 = scmp.eq.s32.totalorder %s24, 0
      %p51 = por %p49, %p50
      %s53 = sadd.s32 %s52, 1
      %p56 = scmp.eq.s32.totalorder %s18, 1
      %p57 = scmp.ne.s32.totalorder %s52, %s54
      %p58 = scmp.eq.s32.totalorder %s18, 0
      %p59 = por %p57, %p58
      %p60 = scmp.ne.s32.totalorder %s52, %s54
      %p61 = scmp.eq.s32.totalorder %s23, 1
      %p62 = por %p60, %p61
      %p63 = scmp.ne.s32.totalorder %s54, %s55
      %p64 = scmp.eq.s32.totalorder %s23, 0
      %p65 = por %p63, %p64
      %p66 = scmp.ne.s32.totalorder %s54, %s55
      %p67 = scmp.eq.s32.totalorder %s24, 1
      %p68 = por %p66, %p67
      %p70 = scmp.ne.s32.totalorder %s55, %s69
      %p71 = scmp.eq.s32.totalorder %s24, 0
      %p72 = por %p70, %p71
      %s74 = sadd.s32 %s73, 1
      %p77 = scmp.eq.s32.totalorder %s18, 1
      %p78 = scmp.ne.s32.totalorder %s73, %s75
      %p79 = scmp.eq.s32.totalorder %s18, 0
      %p80 = por %p78, %p79
      %p81 = scmp.ne.s32.totalorder %s73, %s75
      %p82 = scmp.eq.s32.totalorder %s23, 1
      %p83 = por %p81, %p82
      %p84 = scmp.ne.s32.totalorder %s75, %s76
      %p85 = scmp.eq.s32.totalorder %s23, 0
      %p86 = por %p84, %p85
      %p87 = scmp.ne.s32.totalorder %s75, %s76
      %p88 = scmp.eq.s32.totalorder %s24, 1
      %p89 = por %p87, %p88
      %p91 = scmp.ne.s32.totalorder %s76, %s90
      %p92 = scmp.eq.s32.totalorder %s24, 0
      %p93 = por %p91, %p92
      %s95 = sadd.s32 %s94, 1
      %p98 = scmp.eq.s32.totalorder %s18, 1
      %p99 = scmp.ne.s32.totalorder %s94, %s96
      %p100 = scmp.eq.s32.totalorder %s18, 0
      %p101 = por %p99, %p100
      %p102 = scmp.ne.s32.totalorder %s94, %s96
      %p103 = scmp.eq.s32.totalorder %s23, 1
      %p104 = por %p102, %p103
      %p105 = scmp.ne.s32.totalorder %s96, %s97
      %p106 = scmp.eq.s32.totalorder %s23, 0
      %p107 = por %p105, %p106
      %p108 = scmp.ne.s32.totalorder %s96, %s97
      %p109 = scmp.eq.s32.totalorder %s24, 1
      %p110 = por %p108, %p109
      %p112 = scmp.ne.s32.totalorder %s97, %s111
      %p113 = scmp.eq.s32.totalorder %s24, 0
      %p114 = por %p112, %p113
      %s116 = sadd.s32 %s115, 1
      %p119 = scmp.eq.s32.totalorder %s18, 1
      %p120 = scmp.ne.s32.totalorder %s115, %s117
      %p121 = scmp.eq.s32.totalorder %s18, 0
      %p122 = por %p120, %p121
      %p123 = scmp.ne.s32.totalorder %s115, %s117
      %p124 = scmp.eq.s32.totalorder %s23, 1
      %p125 = por %p123, %p124
      %p126 = scmp.ne.s32.totalorder %s117, %s118
      %p127 = scmp.eq.s32.totalorder %s23, 0
      %p128 = por %p126, %p127
      %p129 = scmp.ne.s32.totalorder %s117, %s118
      %p130 = scmp.eq.s32.totalorder %s24, 1
      %p131 = por %p129, %p130
      %p133 = scmp.ne.s32.totalorder %s118, %s132
      %p134 = scmp.eq.s32.totalorder %s24, 0
      %p135 = por %p133, %p134
      %s137 = sadd.s32 %s136, 1
      %p140 = scmp.eq.s32.totalorder %s18, 1
      %p141 = scmp.ne.s32.totalorder %s136, %s138
      %p142 = scmp.eq.s32.totalorder %s18, 0
      %p143 = por %p141, %p142
      %p144 = scmp.ne.s32.totalorder %s136, %s138
      %p145 = scmp.eq.s32.totalorder %s23, 1
      %p146 = por %p144, %p145
      %p147 = scmp.ne.s32.totalorder %s138, %s139
      %p148 = scmp.eq.s32.totalorder %s23, 0
      %p149 = por %p147, %p148
      %p150 = scmp.ne.s32.totalorder %s138, %s139
      %p151 = scmp.eq.s32.totalorder %s24, 1
      %p152 = por %p150, %p151
      %p154 = scmp.ne.s32.totalorder %s139, %s153
      %p155 = scmp.eq.s32.totalorder %s24, 0
      %p156 = por %p154, %p155
      %s158 = sadd.s32 %s157, 1
      %p161 = scmp.eq.s32.totalorder %s18, 1
      %p162 = scmp.ne.s32.totalorder %s157, %s159
      %p163 = scmp.eq.s32.totalorder %s18, 0
      %p164 = por %p162, %p163
      %p165 = scmp.ne.s32.totalorder %s157, %s159
      %p166 = scmp.eq.s32.totalorder %s23, 1
      %p167 = por %p165, %p166
      %p168 = scmp.ne.s32.totalorder %s159, %s160
      %p169 = scmp.eq.s32.totalorder %s23, 0
      %p170 = por %p168, %p169
      %p171 = scmp.ne.s32.totalorder %s159, %s160
      %p172 = scmp.eq.s32.totalorder %s24, 1
      %p173 = por %p171, %p172
      %p175 = scmp.ne.s32.totalorder %s160, %s174
      %p176 = scmp.eq.s32.totalorder %s24, 0
      %p177 = por %p175, %p176
      %s179 = sadd.s32 %s178, 1
      %p182 = scmp.eq.s32.totalorder %s18, 1
      %p183 = scmp.ne.s32.totalorder %s178, %s180
      %p184 = scmp.eq.s32.totalorder %s18, 0
      %p185 = por %p183, %p184
      %p186 = scmp.ne.s32.totalorder %s178, %s180
      %p187 = scmp.eq.s32.totalorder %s23, 1
      %p188 = por %p186, %p187
      %p189 = scmp.ne.s32.totalorder %s180, %s181
      %p190 = scmp.eq.s32.totalorder %s23, 0
      %p191 = por %p189, %p190
      %p192 = scmp.ne.s32.totalorder %s180, %s181
      %p193 = scmp.eq.s32.totalorder %s24, 1
      %p194 = por %p192, %p193
      %p196 = scmp.ne.s32.totalorder %s181, %s195
      %p197 = scmp.eq.s32.totalorder %s24, 0
      %p198 = por %p196, %p197
      %s200 = sadd.s32 %s199, 1
      %p203 = scmp.eq.s32.totalorder %s18, 1
      %p204 = scmp.ne.s32.totalorder %s199, %s201
      %p205 = scmp.eq.s32.totalorder %s18, 0
      %p206 = por %p204, %p205
      %p207 = scmp.ne.s32.totalorder %s199, %s201
      %p208 = scmp.eq.s32.totalorder %s23, 1
      %p209 = por %p207, %p208
      %p210 = scmp.ne.s32.totalorder %s201, %s202
      %p211 = scmp.eq.s32.totalorder %s23, 0
      %p212 = por %p210, %p211
      %p213 = scmp.ne.s32.totalorder %s201, %s202
      %p214 = scmp.eq.s32.totalorder %s24, 1
      %p215 = por %p213, %p214
      %p217 = scmp.ne.s32.totalorder %s202, %s216
      %p218 = scmp.eq.s32.totalorder %s24, 0
      %p219 = por %p217, %p218
      %s220 = ssub.s32 %s18, %s25
      %p221 = scmp.eq.s32.totalorder %s220, 0
      %s223 = sadd.s32 %s222, 1
      %s224 = scalar_select %p221, %s222, %s223
      %p227 = pneg %p221
      %p228 = scmp.eq.s32.totalorder %s18, 1
      %p229 = por %p227, %p228
      %p230 = scmp.ne.s32.totalorder %s222, %s225
      %p231 = scmp.eq.s32.totalorder %s18, 0
      %p232 = por %p230, %p231
      %p233 = scmp.ne.s32.totalorder %s222, %s225
      %p234 = scmp.eq.s32.totalorder %s23, 1
      %p235 = por %p233, %p234
      %p236 = scmp.ne.s32.totalorder %s225, %s226
      %p237 = scmp.eq.s32.totalorder %s23, 0
      %p238 = por %p236, %p237
      %p239 = scmp.ne.s32.totalorder %s225, %s226
      %p240 = scmp.eq.s32.totalorder %s24, 1
      %p241 = por %p239, %p240
      %p243 = scmp.ne.s32.totalorder %s226, %s242
      %p244 = scmp.eq.s32.totalorder %s24, 0
      %p245 = por %p243, %p244
      %p246 = scmp.le.s32.totalorder 1, %s18
      %p247 = scmp.lt.s32.totalorder %s18, 3
      %p248 = pnand %p246, %p247
      %p249 = pneg %p248
      // Predicated region
      $region9: #{sc_forward.1} parent=5 // pred_check
        _
      $region10: #{sc_forward.1} parent=5 // pred_check_branch
        %251 = sbr.rel (%p248) target = $region12
      $region11: #{sc_forward.1} parent=5 // pred_region
        %s252 = ssub.s32 %s18, 1
        // Predicated region
        $region13: #{sc_forward.1} parent=11 // pred_check
          %p253 = pneg %p65
        $region14: #{sc_forward.1} parent=11 // pred_check_branch
          %255 = sbr.rel (%p253) target = $region16
        $region15: #{sc_forward.1} parent=11 // pred_region
          _
        $region16: #{sc_forward.1} parent=11 // pred_fallthru
          _
        // Predicated region
        $region17: #{sc_forward.1} parent=11 // pred_check
          %p256 = pneg %p86
        $region18: #{sc_forward.1} parent=11 // pred_check_branch
          %258 = sbr.rel (%p256) target = $region20
        $region19: #{sc_forward.1} parent=11 // pred_region
          _
        $region20: #{sc_forward.1} parent=11 // pred_fallthru
          _
        // Predicated region
        $region21: #{sc_forward.1} parent=11 // pred_check
          %p259 = pneg %p107
        $region22: #{sc_forward.1} parent=11 // pred_check_branch
          %261 = sbr.rel (%p259) target = $region24
        $region23: #{sc_forward.1} parent=11 // pred_region
          _
        $region24: #{sc_forward.1} parent=11 // pred_fallthru
          _
        // Predicated region
        $region25: #{sc_forward.1} parent=11 // pred_check
          %p262 = pneg %p128
        $region26: #{sc_forward.1} parent=11 // pred_check_branch
          %264 = sbr.rel (%p262) target = $region28
        $region27: #{sc_forward.1} parent=11 // pred_region
          _
        $region28: #{sc_forward.1} parent=11 // pred_fallthru
          _
        // Predicated region
        $region29: #{sc_forward.1} parent=11 // pred_check
          %p265 = pneg %p149
        $region30: #{sc_forward.1} parent=11 // pred_check_branch
          %267 = sbr.rel (%p265) target = $region32
        $region31: #{sc_forward.1} parent=11 // pred_region
          _
        $region32: #{sc_forward.1} parent=11 // pred_fallthru
          _
        // Predicated region
        $region33: #{sc_forward.1} parent=11 // pred_check
          %p268 = pneg %p170
        $region34: #{sc_forward.1} parent=11 // pred_check_branch
          %270 = sbr.rel (%p268) target = $region36
        $region35: #{sc_forward.1} parent=11 // pred_region
          _
        $region36: #{sc_forward.1} parent=11 // pred_fallthru
          _
        // Predicated region
        $region37: #{sc_forward.1} parent=11 // pred_check
          %p271 = pneg %p191
        $region38: #{sc_forward.1} parent=11 // pred_check_branch
          %273 = sbr.rel (%p271) target = $region40
        $region39: #{sc_forward.1} parent=11 // pred_region
          _
        $region40: #{sc_forward.1} parent=11 // pred_fallthru
          _
        // Predicated region
        $region41: #{sc_forward.1} parent=11 // pred_check
          %p274 = pneg %p212
        $region42: #{sc_forward.1} parent=11 // pred_check_branch
          %276 = sbr.rel (%p274) target = $region44
        $region43: #{sc_forward.1} parent=11 // pred_region
          _
        $region44: #{sc_forward.1} parent=11 // pred_fallthru
          _
      $region12: #{sc_forward.1} parent=5 // pred_fallthru
        _
      %p277 = scmp.lt.s32.totalorder %s18, 2
      // Predicated region
      $region45: #{sc_forward.1} parent=5 // pred_check
        %p278 = pneg %p277
      $region46: #{sc_forward.1} parent=5 // pred_check_branch
        %280 = sbr.rel (%p278) target = $region48
      $region47: #{sc_forward.1} parent=5 // pred_region
        // Predicated region
        $region49: #{sc_forward.1} parent=47 // pred_check
          %p281 = pneg %p38
        $region50: #{sc_forward.1} parent=47 // pred_check_branch
          %283 = sbr.rel (%p281) target = $region52
        $region51: #{sc_forward.1} parent=47 // pred_region
          %p284 = scmp.lt.s32.totalorder %s18, 1
          %s285 = scalar_select %p284, %s18, 1
          %s286 = smul.addr %s285, 32
          %s287 = smul.addr %s286, 8
          %s288 = scalar_lea.vmem %s0, %s287
        $region52: #{sc_forward.1} parent=47 // pred_fallthru
          _
      $region48: #{sc_forward.1} parent=5 // pred_fallthru
        _
      %p289 = scmp.le.s32.totalorder 1, %s18
      %p290 = scmp.lt.s32.totalorder %s18, 3
      %p291 = pnand %p289, %p290
      %p292 = pneg %p291
      // Predicated region
      $region53: #{sc_forward.1} parent=5 // pred_check
        _
      $region54: #{sc_forward.1} parent=5 // pred_check_branch
        %294 = sbr.rel (%p291) target = $region56
      $region55: #{sc_forward.1} parent=5 // pred_region
        %s295 = ssub.s32 %s18, 1
        %p296 = scmp.lt.s32.totalorder %s23, 1
        %s297 = scalar_select %p296, %s23, 1
        %s298 = smul.addr %s297, 32
        %s299 = smul.addr %s298, 8
        %s300 = scalar_lea.vmem %s0, %s299
        %p301 = pneg %p44
        %p302 = pneg %p41
        %p303 = pneg %p65
        %p304 = pneg %p62
        %p305 = pneg %p86
        %p306 = pneg %p83
        %p307 = pneg %p107
        %p308 = pneg %p104
        %p309 = pneg %p128
        %p310 = pneg %p125
        %p311 = pneg %p149
        %p312 = pneg %p146
        %p313 = pneg %p170
        %p314 = pneg %p167
        %p315 = pneg %p191
        %p316 = pneg %p188
        %p317 = pneg %p212
        %p318 = pneg %p209
        %p319 = pneg %p238
        %p320 = pneg %p235
        %s321 = sand.u32 %s225, 1
        %s322 = scalar_lea.sflag [#allocation3], %s321
        %s323 = sand.u32 %s225, 1
        %s324 = smul.addr %s323, 64
        %s325 = scalar_lea.vmem [#allocation2], %s324
        %p326 = scmp.lt.s32.totalorder %s23, 1
        %s327 = scalar_select %p326, %s23, 1
        %s328 = smul.addr %s327, 32
        %s329 = smul.addr %s328, 8
        %s330 = scalar_lea.vmem %s0, %s329
        %v331 = vld [vmem:[%s330] sm:$0xff]
        %v332 = vld [vmem:[%s330 + $0x8] sm:$0x1]
        %v333 = vld [vmem:[%s330 + $0x10] sm:$0xff]
        %v334 = vld [vmem:[%s330 + $0x18] sm:$0x1]
        %v335 = vld [vmem:[%s330 + $0x20] sm:$0xff]
        %v336 = vld [vmem:[%s330 + $0x28] sm:$0x1]
        %v337 = vld [vmem:[%s330 + $0x30] sm:$0xff]
        %v338 = vld [vmem:[%s330 + $0x38] sm:$0x1]
        %v339 = vld [vmem:[%s330 + $0x40] sm:$0xff]
        %v340 = vld [vmem:[%s330 + $0x48] sm:$0x1]
        %v341 = vld [vmem:[%s330 + $0x50] sm:$0xff]
        %v342 = vld [vmem:[%s330 + $0x58] sm:$0x1]
        %v343 = vld [vmem:[%s330 + $0x60] sm:$0xff]
        %v344 = vld [vmem:[%s330 + $0x68] sm:$0x1]
        %v345 = vld [vmem:[%s330 + $0x70] sm:$0xff]
        %v346 = vld [vmem:[%s330 + $0x78] sm:$0x1]
        %v347 = vld [vmem:[%s330 + $0x80] sm:$0xff]
        %v348 = vld [vmem:[%s330 + $0x88] sm:$0x1]
        %v349 = vld [vmem:[%s330 + $0x90] sm:$0xff]
        %v350 = vld [vmem:[%s330 + $0x98] sm:$0x1]
        %v351 = vld [vmem:[%s330 + $0xa0] sm:$0xff]
        %v352 = vld [vmem:[%s330 + $0xa8] sm:$0x1]
        %v353 = vld [vmem:[%s330 + $0xb0] sm:$0xff]
        %v354 = vld [vmem:[%s330 + $0xb8] sm:$0x1]
        %v355 = vld [vmem:[%s330 + $0xc0] sm:$0xff]
        %v356 = vld [vmem:[%s330 + $0xc8] sm:$0x1]
        %v357 = vld [vmem:[%s330 + $0xd0] sm:$0xff]
        %v358 = vld [vmem:[%s330 + $0xd8] sm:$0x1]
        %v359 = vld [vmem:[%s330 + $0xe0] sm:$0xff]
        %v360 = vld [vmem:[%s330 + $0xe8] sm:$0x1]
        %v361 = vld [vmem:[%s330 + $0xf0] sm:$0xff]
        %v362 = vld [vmem:[%s330 + $0xf8] sm:$0x1]
        %vm395 = vcmask 1046528
        %v396 = vrot.slane %v331, 1
        %v397 = vrot.slane %v332, 1
        %v398 = vsel %vm395, %v396, %v397
        %v399 = vrot.slane %v333, 1
        %v400 = vrot.slane %v334, 1
        %v401 = vsel %vm395, %v399, %v400
        %v402 = vrot.slane %v335, 1
        %v403 = vrot.slane %v336, 1
        %v404 = vsel %vm395, %v402, %v403
        %v405 = vrot.slane %v337, 1
        %v406 = vrot.slane %v338, 1
        %v407 = vsel %vm395, %v405, %v406
        %v408 = vrot.slane %v339, 1
        %v409 = vrot.slane %v340, 1
        %v410 = vsel %vm395, %v408, %v409
        %v411 = vrot.slane %v341, 1
        %v412 = vrot.slane %v342, 1
        %v413 = vsel %vm395, %v411, %v412
        %v414 = vrot.slane %v343, 1
        %v415 = vrot.slane %v344, 1
        %v416 = vsel %vm395, %v414, %v415
        %v417 = vrot.slane %v345, 1
        %v418 = vrot.slane %v346, 1
        %v419 = vsel %vm395, %v417, %v418
        %v420 = vrot.slane %v347, 1
        %v421 = vrot.slane %v348, 1
        %v422 = vsel %vm395, %v420, %v421
        %v423 = vrot.slane %v349, 1
        %v424 = vrot.slane %v350, 1
        %v425 = vsel %vm395, %v423, %v424
        %v426 = vrot.slane %v351, 1
        %v427 = vrot.slane %v352, 1
        %v428 = vsel %vm395, %v426, %v427
        %v429 = vrot.slane %v353, 1
        %v430 = vrot.slane %v354, 1
        %v431 = vsel %vm395, %v429, %v430
        %v432 = vrot.slane %v355, 1
        %v433 = vrot.slane %v356, 1
        %v434 = vsel %vm395, %v432, %v433
        %v435 = vrot.slane %v357, 1
        %v436 = vrot.slane %v358, 1
        %v437 = vsel %vm395, %v435, %v436
        %v438 = vrot.slane %v359, 1
        %v439 = vrot.slane %v360, 1
        %v440 = vsel %vm395, %v438, %v439
        %v441 = vrot.slane %v361, 1
        %v442 = vrot.slane %v362, 1
        %v443 = vsel %vm395, %v441, %v442
        %444 = vrot.lane.b32.xlu0 %v398, 8
        %v445 = vpop.permute.xlu0 %444
        %446 = vrot.lane.b32.xlu0 %v401, 8
        %v447 = vpop.permute.xlu0 %446
        %448 = vrot.lane.b32.xlu0 %v404, 8
        %v449 = vpop.permute.xlu0 %448
        %450 = vrot.lane.b32.xlu0 %v407, 8
        %v451 = vpop.permute.xlu0 %450
        %452 = vrot.lane.b32.xlu0 %v410, 8
        %v453 = vpop.permute.xlu0 %452
        %454 = vrot.lane.b32.xlu0 %v413, 8
        %v455 = vpop.permute.xlu0 %454
        %456 = vrot.lane.b32.xlu0 %v416, 8
        %v457 = vpop.permute.xlu0 %456
        %458 = vrot.lane.b32.xlu0 %v419, 8
        %v459 = vpop.permute.xlu0 %458
        %460 = vrot.lane.b32.xlu0 %v422, 8
        %v461 = vpop.permute.xlu0 %460
        %462 = vrot.lane.b32.xlu0 %v425, 8
        %v463 = vpop.permute.xlu0 %462
        %464 = vrot.lane.b32.xlu0 %v428, 8
        %v465 = vpop.permute.xlu0 %464
        %466 = vrot.lane.b32.xlu0 %v431, 8
        %v467 = vpop.permute.xlu0 %466
        %468 = vrot.lane.b32.xlu0 %v434, 8
        %v469 = vpop.permute.xlu0 %468
        %470 = vrot.lane.b32.xlu0 %v437, 8
        %v471 = vpop.permute.xlu0 %470
        %472 = vrot.lane.b32.xlu0 %v440, 8
        %v473 = vpop.permute.xlu0 %472
        %474 = vrot.lane.b32.xlu0 %v443, 8
        %v475 = vpop.permute.xlu0 %474
        %vm492 = vcmask 64512
        %v493 = vsel %vm492, %v331, %v445
        %v494 = vsel %vm492, %v333, %v447
        %v495 = vsel %vm492, %v335, %v449
        %v496 = vsel %vm492, %v337, %v451
        %v497 = vsel %vm492, %v339, %v453
        %v498 = vsel %vm492, %v341, %v455
        %v499 = vsel %vm492, %v343, %v457
        %v500 = vsel %vm492, %v345, %v459
        %v501 = vsel %vm492, %v347, %v461
        %v502 = vsel %vm492, %v349, %v463
        %v503 = vsel %vm492, %v351, %v465
        %v504 = vsel %vm492, %v353, %v467
        %v505 = vsel %vm492, %v355, %v469
        %v506 = vsel %vm492, %v357, %v471
        %v507 = vsel %vm492, %v359, %v473
        %v508 = vsel %vm492, %v361, %v475
        %v509 = vld [vmem:[%s1] sm:$0xff]
        %v510 = vld [vmem:[%s1 + $0x8] sm:$0xf]
        %v511 = vld [vmem:[%s2] sm:$0x1]
        %v513 = vperm.slane %v511, 0
        %vm515 = vcmask 97280
        %v517 = vsel %vm515, %v493, 0
        %v520 = vsel %vm515, %v494, 0
        %v523 = vsel %vm515, %v495, 0
        %v526 = vsel %vm515, %v496, 0
        %v529 = vsel %vm515, %v497, 0
        %v532 = vsel %vm515, %v498, 0
        %v535 = vsel %vm515, %v499, 0
        %v538 = vsel %vm515, %v500, 0
        %v541 = vsel %vm515, %v501, 0
        %v544 = vsel %vm515, %v502, 0
        %v547 = vsel %vm515, %v503, 0
        %v550 = vsel %vm515, %v504, 0
        %v553 = vsel %vm515, %v505, 0
        %v556 = vsel %vm515, %v506, 0
        %v559 = vsel %vm515, %v507, 0
        %v562 = vsel %vm515, %v508, 0
        %vm564 = vcmask 1043456
        %v566 = vsel %vm564, %v510, 0
        %568 = vmatpush.msra.mxu0 0.0
        %569 = vmatpush.msra.mxu0 0.0
        %570 = vmatpush.msra.mxu0 0.0
        %571 = vmatpush.msra.mxu0 0.0
        %572 = vmatpush.msra.mxu0 0.0
        %573 = vmatpush.msra.mxu0 0.0
        %574 = vmatpush.msra.mxu0 0.0
        %575 = vmatpush.msra.mxu0 0.0
        %576 = vmatpush.msra.mxu0 0.0
        %577 = vmatpush.msra.mxu0 0.0
        %578 = vmatpush.msra.mxu0 0.0
        %579 = vmatpush.msra.mxu0 0.0
        %580 = vmatpush.msra.mxu0 0.0
        %581 = vmatpush.msra.mxu0 0.0
        %582 = vmatpush.msra.mxu0 %v566
        %583 = vmatpush.msra.mxu0 %v509
        %584 = vmatmul.f32.gmra.mxu0 %v517
        %v585 = vpop.f32.mrf.mxu0
        %v586 = vadd.f32 %v513, %v585
        %587 = vmatmul.f32.gmra.mxu0 %v520
        %v588 = vpop.f32.mrf.mxu0
        %v589 = vadd.f32 %v513, %v588
        %590 = vmatmul.f32.gmra.mxu0 %v523
        %v591 = vpop.f32.mrf.mxu0
        %v592 = vadd.f32 %v513, %v591
        %593 = vmatmul.f32.gmra.mxu0 %v526
        %v594 = vpop.f32.mrf.mxu0
        %v595 = vadd.f32 %v513, %v594
        %596 = vmatmul.f32.gmra.mxu0 %v529
        %v597 = vpop.f32.mrf.mxu0
        %v598 = vadd.f32 %v513, %v597
        %599 = vmatmul.f32.gmra.mxu0 %v532
        %v600 = vpop.f32.mrf.mxu0
        %v601 = vadd.f32 %v513, %v600
        %602 = vmatmul.f32.gmra.mxu0 %v535
        %v603 = vpop.f32.mrf.mxu0
        %v604 = vadd.f32 %v513, %v603
        %605 = vmatmul.f32.gmra.mxu0 %v538
        %v606 = vpop.f32.mrf.mxu0
        %v607 = vadd.f32 %v513, %v606
        %608 = vmatmul.f32.gmra.mxu0 %v541
        %v609 = vpop.f32.mrf.mxu0
        %v610 = vadd.f32 %v513, %v609
        %611 = vmatmul.f32.gmra.mxu0 %v544
        %v612 = vpop.f32.mrf.mxu0
        %v613 = vadd.f32 %v513, %v612
        %614 = vmatmul.f32.gmra.mxu0 %v547
        %v615 = vpop.f32.mrf.mxu0
        %v616 = vadd.f32 %v513, %v615
        %617 = vmatmul.f32.gmra.mxu0 %v550
        %v618 = vpop.f32.mrf.mxu0
        %v619 = vadd.f32 %v513, %v618
        %620 = vmatmul.f32.gmra.mxu0 %v553
        %v621 = vpop.f32.mrf.mxu0
        %v622 = vadd.f32 %v513, %v621
        %623 = vmatmul.f32.gmra.mxu0 %v556
        %v624 = vpop.f32.mrf.mxu0
        %v625 = vadd.f32 %v513, %v624
        %626 = vmatmul.f32.gmra.mxu0 %v559
        %v627 = vpop.f32.mrf.mxu0
        %v628 = vadd.f32 %v513, %v627
        %629 = vmatmul.f32.gmra.mxu0 %v562
        %v630 = vpop.f32.mrf.mxu0
        %v631 = vadd.f32 %v513, %v630
        %632 = vdwg.mxu0
        %v633 = vmax.f32 %v586, 0.0
        %v634 = vmax.f32 %v589, 0.0
        %v635 = vmax.f32 %v592, 0.0
        %v636 = vmax.f32 %v595, 0.0
        %v637 = vmax.f32 %v598, 0.0
        %v638 = vmax.f32 %v601, 0.0
        %v639 = vmax.f32 %v604, 0.0
        %v640 = vmax.f32 %v607, 0.0
        %v641 = vmax.f32 %v610, 0.0
        %v642 = vmax.f32 %v613, 0.0
        %v643 = vmax.f32 %v616, 0.0
        %v644 = vmax.f32 %v619, 0.0
        %v645 = vmax.f32 %v622, 0.0
        %v646 = vmax.f32 %v625, 0.0
        %v647 = vmax.f32 %v628, 0.0
        %v648 = vmax.f32 %v631, 0.0
        %vm649 = vcmask 261120
        %v650 = vsel %vm649, %v633, 0.0
        %v651 = vsel %vm649, %v634, 0.0
        %v652 = vadd.f32 %v650, %v651
        %v653 = vsel %vm649, %v635, 0.0
        %v654 = vadd.f32 %v652, %v653
        %v655 = vsel %vm649, %v636, 0.0
        %v656 = vadd.f32 %v654, %v655
        %v657 = vsel %vm649, %v637, 0.0
        %v658 = vadd.f32 %v656, %v657
        %v659 = vsel %vm649, %v638, 0.0
        %v660 = vadd.f32 %v658, %v659
        %v661 = vsel %vm649, %v639, 0.0
        %v662 = vadd.f32 %v660, %v661
        %v663 = vsel %vm649, %v640, 0.0
        %v664 = vadd.f32 %v662, %v663
        %v665 = vsel %vm649, %v641, 0.0
        %v666 = vadd.f32 %v664, %v665
        %v667 = vsel %vm649, %v642, 0.0
        %v668 = vadd.f32 %v666, %v667
        %v669 = vsel %vm649, %v643, 0.0
        %v670 = vadd.f32 %v668, %v669
        %v671 = vsel %vm649, %v644, 0.0
        %v672 = vadd.f32 %v670, %v671
        %v673 = vsel %vm649, %v645, 0.0
        %v674 = vadd.f32 %v672, %v673
        %v675 = vsel %vm649, %v646, 0.0
        %v676 = vadd.f32 %v674, %v675
        %v677 = vsel %vm649, %v647, 0.0
        %v678 = vadd.f32 %v676, %v677
        %v679 = vsel %vm649, %v648, 0.0
        %v680 = vadd.f32 %v678, %v679
        %681 = vadd.xlane.f32.xlu0 %v680
        %v682 = vpop.xlane.xlu0 %681
        %v683 = vrot.slane %v682, 4
        %v684 = vadd.f32 %v682, %v683
        %v685 = vrot.slane %v684, 2
        %v686 = vadd.f32 %v684, %v685
        %v687 = vrot.slane %v686, 1
        %v688 = vadd.f32 %v686, %v687
        %s689 = vtos %v688
        %v690 = vrcp.pop 4096.0
        %v691 = vmul.f32 4096.0, %v690
        %v692 = vsub.f32 1.0, %v691
        %v693 = vmul.f32 %v690, %v692
        %v694 = vadd.f32 %v690, %v693
        %vm695 = vweird.f32 %v690
        %v696 = vsel %vm695, %v690, %v694
        %s697 = vtos %v696
        %s698 = smul.f32 %s689, %s697
        %v699 = vmul.f32 %v633, %v633
        %v700 = vmul.f32 %v634, %v634
        %v701 = vmul.f32 %v635, %v635
        %v702 = vmul.f32 %v636, %v636
        %v703 = vmul.f32 %v637, %v637
        %v704 = vmul.f32 %v638, %v638
        %v705 = vmul.f32 %v639, %v639
        %v706 = vmul.f32 %v640, %v640
        %v707 = vmul.f32 %v641, %v641
        %v708 = vmul.f32 %v642, %v642
        %v709 = vmul.f32 %v643, %v643
        %v710 = vmul.f32 %v644, %v644
        %v711 = vmul.f32 %v645, %v645
        %v712 = vmul.f32 %v646, %v646
        %v713 = vmul.f32 %v647, %v647
        %v714 = vmul.f32 %v648, %v648
        %v715 = vsel %vm649, %v699, 0.0
        %v716 = vsel %vm649, %v700, 0.0
        %v717 = vadd.f32 %v715, %v716
        %v718 = vsel %vm649, %v701, 0.0
        %v719 = vadd.f32 %v717, %v718
        %v720 = vsel %vm649, %v702, 0.0
        %v721 = vadd.f32 %v719, %v720
        %v722 = vsel %vm649, %v703, 0.0
        %v723 = vadd.f32 %v721, %v722
        %v724 = vsel %vm649, %v704, 0.0
        %v725 = vadd.f32 %v723, %v724
        %v726 = vsel %vm649, %v705, 0.0
        %v727 = vadd.f32 %v725, %v726
        %v728 = vsel %vm649, %v706, 0.0
        %v729 = vadd.f32 %v727, %v728
        %v730 = vsel %vm649, %v707, 0.0
        %v731 = vadd.f32 %v729, %v730
        %v732 = vsel %vm649, %v708, 0.0
        %v733 = vadd.f32 %v731, %v732
        %v734 = vsel %vm649, %v709, 0.0
        %v735 = vadd.f32 %v733, %v734
        %v736 = vsel %vm649, %v710, 0.0
        %v737 = vadd.f32 %v735, %v736
        %v738 = vsel %vm649, %v711, 0.0
        %v739 = vadd.f32 %v737, %v738
        %v740 = vsel %vm649, %v712, 0.0
        %v741 = vadd.f32 %v739, %v740
        %v742 = vsel %vm649, %v713, 0.0
        %v743 = vadd.f32 %v741, %v742
        %v744 = vsel %vm649, %v714, 0.0
        %v745 = vadd.f32 %v743, %v744
        %746 = vadd.xlane.f32.xlu0 %v745
        %v747 = vpop.xlane.xlu0 %746
        %v748 = vrot.slane %v747, 4
        %v749 = vadd.f32 %v747, %v748
        %v750 = vrot.slane %v749, 2
        %v751 = vadd.f32 %v749, %v750
        %v752 = vrot.slane %v751, 1
        %v753 = vadd.f32 %v751, %v752
        %s754 = vtos %v753
        %v755 = vrcp.pop 4096.0
        %v756 = vmul.f32 4096.0, %v755
        %v757 = vsub.f32 1.0, %v756
        %v758 = vmul.f32 %v755, %v757
        %v759 = vadd.f32 %v755, %v758
        %vm760 = vweird.f32 %v755
        %v761 = vsel %vm760, %v755, %v759
        %s762 = vtos %v761
        %s763 = smul.f32 %s754, %s762
        %s764 = smul.f32 %s698, %s698
        %s765 = ssub.f32 %s763, %s764
        %v766 = vstv %s698
        %v767 = vsub.f32 %v633, %v766
        %v768 = vsub.f32 %v634, %v766
        %v769 = vsub.f32 %v635, %v766
        %v770 = vsub.f32 %v636, %v766
        %v771 = vsub.f32 %v637, %v766
        %v772 = vsub.f32 %v638, %v766
        %v773 = vsub.f32 %v639, %v766
        %v774 = vsub.f32 %v640, %v766
        %v775 = vsub.f32 %v641, %v766
        %v776 = vsub.f32 %v642, %v766
        %v777 = vsub.f32 %v643, %v766
        %v778 = vsub.f32 %v644, %v766
        %v779 = vsub.f32 %v645, %v766
        %v780 = vsub.f32 %v646, %v766
        %v781 = vsub.f32 %v647, %v766
        %v782 = vsub.f32 %v648, %v766
        %s783 = sadd.f32 %s765, 1e-05
        %v784 = vstv %s783
        %v785 = vrsqrt.pop %v784
        %v786 = vmul.f32 %v785, %v784
        %v787 = vmul.f32 %v786, %v785
        %v788 = vmul.f32 0.5, %v787
        %v789 = vsub.f32 1.5, %v788
        %v790 = vmul.f32 %v785, %v789
        %vm791 = vweird.f32 %v784
        %vm792 = vweird.f32 %v785
        %vm793 = vmor %vm791, %vm792
        %v794 = vsel %vm793, %v785, %v790
        %s795 = vtos %v794
        %v796 = vstv %s795
        %v797 = vmul.f32 %v767, %v796
        %v798 = vmul.f32 %v768, %v796
        %v799 = vmul.f32 %v769, %v796
        %v800 = vmul.f32 %v770, %v796
        %v801 = vmul.f32 %v771, %v796
        %v802 = vmul.f32 %v772, %v796
        %v803 = vmul.f32 %v773, %v796
        %v804 = vmul.f32 %v774, %v796
        %v805 = vmul.f32 %v775, %v796
        %v806 = vmul.f32 %v776, %v796
        %v807 = vmul.f32 %v777, %v796
        %v808 = vmul.f32 %v778, %v796
        %v809 = vmul.f32 %v779, %v796
        %v810 = vmul.f32 %v780, %v796
        %v811 = vmul.f32 %v781, %v796
        %v812 = vmul.f32 %v782, %v796
        %v813 = vld [vmem:[%s3] sm:$0xff]
        %v814 = vld [vmem:[%s3 + $0x8] sm:$0xff]
        %v815 = vld [vmem:[%s3 + $0x10] sm:$0xff]
        %v816 = vld [vmem:[%s3 + $0x18] sm:$0xff]
        %v817 = vld [vmem:[%s3 + $0x20] sm:$0xff]
        %v818 = vld [vmem:[%s3 + $0x28] sm:$0xff]
        %v819 = vld [vmem:[%s3 + $0x30] sm:$0xff]
        %v820 = vld [vmem:[%s3 + $0x38] sm:$0xff]
        %v821 = vld [vmem:[%s3 + $0x40] sm:$0xff]
        %v822 = vld [vmem:[%s3 + $0x48] sm:$0xff]
        %v823 = vld [vmem:[%s3 + $0x50] sm:$0xff]
        %v824 = vld [vmem:[%s3 + $0x58] sm:$0xff]
        %v825 = vld [vmem:[%s3 + $0x60] sm:$0xff]
        %v826 = vld [vmem:[%s3 + $0x68] sm:$0xff]
        %v827 = vld [vmem:[%s3 + $0x70] sm:$0xff]
        %v828 = vld [vmem:[%s3 + $0x78] sm:$0xff]
        %v829 = vmul.f32 %v797, %v813
        %v830 = vmul.f32 %v798, %v814
        %v831 = vmul.f32 %v799, %v815
        %v832 = vmul.f32 %v800, %v816
        %v833 = vmul.f32 %v801, %v817
        %v834 = vmul.f32 %v802, %v818
        %v835 = vmul.f32 %v803, %v819
        %v836 = vmul.f32 %v804, %v820
        %v837 = vmul.f32 %v805, %v821
        %v838 = vmul.f32 %v806, %v822
        %v839 = vmul.f32 %v807, %v823
        %v840 = vmul.f32 %v808, %v824
        %v841 = vmul.f32 %v809, %v825
        %v842 = vmul.f32 %v810, %v826
        %v843 = vmul.f32 %v811, %v827
        %v844 = vmul.f32 %v812, %v828
        %v845 = vld [vmem:[%s4] sm:$0xff]
        %v846 = vld [vmem:[%s4 + $0x8] sm:$0xff]
        %v847 = vld [vmem:[%s4 + $0x10] sm:$0xff]
        %v848 = vld [vmem:[%s4 + $0x18] sm:$0xff]
        %v849 = vld [vmem:[%s4 + $0x20] sm:$0xff]
        %v850 = vld [vmem:[%s4 + $0x28] sm:$0xff]
        %v851 = vld [vmem:[%s4 + $0x30] sm:$0xff]
        %v852 = vld [vmem:[%s4 + $0x38] sm:$0xff]
        %v853 = vld [vmem:[%s4 + $0x40] sm:$0xff]
        %v854 = vld [vmem:[%s4 + $0x48] sm:$0xff]
        %v855 = vld [vmem:[%s4 + $0x50] sm:$0xff]
        %v856 = vld [vmem:[%s4 + $0x58] sm:$0xff]
        %v857 = vld [vmem:[%s4 + $0x60] sm:$0xff]
        %v858 = vld [vmem:[%s4 + $0x68] sm:$0xff]
        %v859 = vld [vmem:[%s4 + $0x70] sm:$0xff]
        %v860 = vld [vmem:[%s4 + $0x78] sm:$0xff]
        %v861 = vadd.f32 %v829, %v845
        %v862 = vadd.f32 %v830, %v846
        %v863 = vadd.f32 %v831, %v847
        %v864 = vadd.f32 %v832, %v848
        %v865 = vadd.f32 %v833, %v849
        %v866 = vadd.f32 %v834, %v850
        %v867 = vadd.f32 %v835, %v851
        %v868 = vadd.f32 %v836, %v852
        %v869 = vadd.f32 %v837, %v853
        %v870 = vadd.f32 %v838, %v854
        %v871 = vadd.f32 %v839, %v855
        %v872 = vadd.f32 %v840, %v856
        %v873 = vadd.f32 %v841, %v857
        %v874 = vadd.f32 %v842, %v858
        %v875 = vadd.f32 %v843, %v859
        %v876 = vadd.f32 %v844, %v860
        %885 = vrot.lane.b32.xlu0 %v861, 32
        %v886 = vpop.permute.xlu0 %885
        %887 = vrot.lane.b32.xlu0 %v863, 32
        %v888 = vpop.permute.xlu0 %887
        %889 = vrot.lane.b32.xlu0 %v865, 32
        %v890 = vpop.permute.xlu0 %889
        %891 = vrot.lane.b32.xlu0 %v867, 32
        %v892 = vpop.permute.xlu0 %891
        %893 = vrot.lane.b32.xlu0 %v869, 32
        %v894 = vpop.permute.xlu0 %893
        %895 = vrot.lane.b32.xlu0 %v871, 32
        %v896 = vpop.permute.xlu0 %895
        %897 = vrot.lane.b32.xlu0 %v873, 32
        %v898 = vpop.permute.xlu0 %897
        %899 = vrot.lane.b32.xlu0 %v875, 32
        %v900 = vpop.permute.xlu0 %899
        %917 = vrot.lane.b32.xlu0 %v862, 64
        %v918 = vpop.permute.xlu0 %917
        %919 = vrot.lane.b32.xlu0 %v864, 64
        %v920 = vpop.permute.xlu0 %919
        %921 = vrot.lane.b32.xlu0 %v866, 64
        %v922 = vpop.permute.xlu0 %921
        %923 = vrot.lane.b32.xlu0 %v868, 64
        %v924 = vpop.permute.xlu0 %923
        %925 = vrot.lane.b32.xlu0 %v870, 64
        %v926 = vpop.permute.xlu0 %925
        %927 = vrot.lane.b32.xlu0 %v872, 64
        %v928 = vpop.permute.xlu0 %927
        %929 = vrot.lane.b32.xlu0 %v874, 64
        %v930 = vpop.permute.xlu0 %929
        %931 = vrot.lane.b32.xlu0 %v876, 64
        %v932 = vpop.permute.xlu0 %931
        %v941 = vsel %vm649, 0.0, %v886
        %v942 = vsel %vm649, %v862, %v888
        %v943 = vsel %vm649, %v864, %v890
        %v944 = vsel %vm649, %v866, %v892
        %v945 = vsel %vm649, %v868, %v894
        %v946 = vsel %vm649, %v870, %v896
        %v947 = vsel %vm649, %v872, %v898
        %v948 = vsel %vm649, %v874, %v900
        %vm949 = vcmask 523264
        %v950 = vsel %vm949, %v941, %v918
        %v951 = vsel %vm949, %v942, %v920
        %v952 = vsel %vm949, %v943, %v922
        %v953 = vsel %vm949, %v944, %v924
        %v954 = vsel %vm949, %v945, %v926
        %v955 = vsel %vm949, %v946, %v928
        %v956 = vsel %vm949, %v947, %v930
        %v957 = vsel %vm949, %v948, %v932
        %v958 = vld [vmem:[%s5] sm:$0xff]
        %v959 = vld [vmem:[%s5 + $0x8] sm:$0xff]
        %v960 = vld [vmem:[%s5 + $0x10] sm:$0xff]
        %v961 = vld [vmem:[%s5 + $0x18] sm:$0xff]
        %v962 = vld [vmem:[%s5 + $0x20] sm:$0xff]
        %v963 = vld [vmem:[%s5 + $0x28] sm:$0xff]
        %v964 = vld [vmem:[%s5 + $0x30] sm:$0xff]
        %v965 = vld [vmem:[%s5 + $0x38] sm:$0xff]
        %v966 = vld [vmem:[%s5 + $0x40] sm:$0xff]
        %v967 = vld [vmem:[%s5 + $0x48] sm:$0xff]
        %v968 = vld [vmem:[%s5 + $0x50] sm:$0xff]
        %v969 = vld [vmem:[%s5 + $0x58] sm:$0xff]
        %v970 = vld [vmem:[%s6] sm:$0x1]
        %v972 = vperm.slane %v970, 0
        %vm974 = vcmask 785408
        %v976 = vsel %vm974, %v950, 0
        %v979 = vsel %vm974, %v951, 0
        %v982 = vsel %vm974, %v952, 0
        %v985 = vsel %vm974, %v953, 0
        %v988 = vsel %vm974, %v954, 0
        %v991 = vsel %vm974, %v955, 0
        %v994 = vsel %vm974, %v956, 0
        %v997 = vsel %vm974, %v957, 0
        %999 = vmatpush.msra.mxu0 0.0
        %1000 = vmatpush.msra.mxu0 0.0
        %1001 = vmatpush.msra.mxu0 0.0
        %1002 = vmatpush.msra.mxu0 0.0
        %1003 = vmatpush.msra.mxu0 %v969
        %1004 = vmatpush.msra.mxu0 %v968
        %1005 = vmatpush.msra.mxu0 %v967
        %1006 = vmatpush.msra.mxu0 %v966
        %1007 = vmatpush.msra.mxu0 %v965
        %1008 = vmatpush.msra.mxu0 %v964
        %1009 = vmatpush.msra.mxu0 %v963
        %1010 = vmatpush.msra.mxu0 %v962
        %1011 = vmatpush.msra.mxu0 %v961
        %1012 = vmatpush.msra.mxu0 %v960
        %1013 = vmatpush.msra.mxu0 %v959
        %1014 = vmatpush.msra.mxu0 %v958
        %1015 = vmatmul.f32.gmra.mxu0 %v976
        %v1016 = vpop.f32.mrf.mxu0
        %v1017 = vadd.f32 %v972, %v1016
        %1018 = vmatmul.f32.gmra.mxu0 %v979
        %v1019 = vpop.f32.mrf.mxu0
        %v1020 = vadd.f32 %v972, %v1019
        %1021 = vmatmul.f32.gmra.mxu0 %v982
        %v1022 = vpop.f32.mrf.mxu0
        %v1023 = vadd.f32 %v972, %v1022
        %1024 = vmatmul.f32.gmra.mxu0 %v985
        %v1025 = vpop.f32.mrf.mxu0
        %v1026 = vadd.f32 %v972, %v1025
        %1027 = vmatmul.f32.gmra.mxu0 %v988
        %v1028 = vpop.f32.mrf.mxu0
        %v1029 = vadd.f32 %v972, %v1028
        %1030 = vmatmul.f32.gmra.mxu0 %v991
        %v1031 = vpop.f32.mrf.mxu0
        %v1032 = vadd.f32 %v972, %v1031
        %1033 = vmatmul.f32.gmra.mxu0 %v994
        %v1034 = vpop.f32.mrf.mxu0
        %v1035 = vadd.f32 %v972, %v1034
        %1036 = vmatmul.f32.gmra.mxu0 %v997
        %v1037 = vpop.f32.mrf.mxu0
        %v1038 = vadd.f32 %v972, %v1037
        %1039 = vdwg.mxu0
        %v1040 = vmax.f32 %v1017, 0.0
        %v1041 = vmax.f32 %v1020, 0.0
        %v1042 = vmax.f32 %v1023, 0.0
        %v1043 = vmax.f32 %v1026, 0.0
        %v1044 = vmax.f32 %v1029, 0.0
        %v1045 = vmax.f32 %v1032, 0.0
        %v1046 = vmax.f32 %v1035, 0.0
        %v1047 = vmax.f32 %v1038, 0.0
        %v1048 = vsel %vm649, %v1040, 0.0
        %v1049 = vsel %vm649, %v1041, 0.0
        %v1050 = vadd.f32 %v1048, %v1049
        %v1051 = vsel %vm649, %v1042, 0.0
        %v1052 = vadd.f32 %v1050, %v1051
        %v1053 = vsel %vm649, %v1043, 0.0
        %v1054 = vadd.f32 %v1052, %v1053
        %v1055 = vsel %vm649, %v1044, 0.0
        %v1056 = vadd.f32 %v1054, %v1055
        %v1057 = vsel %vm649, %v1045, 0.0
        %v1058 = vadd.f32 %v1056, %v1057
        %v1059 = vsel %vm649, %v1046, 0.0
        %v1060 = vadd.f32 %v1058, %v1059
        %v1061 = vsel %vm649, %v1047, 0.0
        %v1062 = vadd.f32 %v1060, %v1061
        %1063 = vadd.xlane.f32.xlu0 %v1062
        %v1064 = vpop.xlane.xlu0 %1063
        %v1065 = vrot.slane %v1064, 4
        %v1066 = vadd.f32 %v1064, %v1065
        %v1067 = vrot.slane %v1066, 2
        %v1068 = vadd.f32 %v1066, %v1067
        %v1069 = vrot.slane %v1068, 1
        %v1070 = vadd.f32 %v1068, %v1069
        %s1071 = vtos %v1070
        %v1072 = vrcp.pop 2048.0
        %v1073 = vmul.f32 2048.0, %v1072
        %v1074 = vsub.f32 1.0, %v1073
        %v1075 = vmul.f32 %v1072, %v1074
        %v1076 = vadd.f32 %v1072, %v1075
        %vm1077 = vweird.f32 %v1072
        %v1078 = vsel %vm1077, %v1072, %v1076
        %s1079 = vtos %v1078
        %s1080 = smul.f32 %s1071, %s1079
        %v1081 = vmul.f32 %v1040, %v1040
        %v1082 = vmul.f32 %v1041, %v1041
        %v1083 = vmul.f32 %v1042, %v1042
        %v1084 = vmul.f32 %v1043, %v1043
        %v1085 = vmul.f32 %v1044, %v1044
        %v1086 = vmul.f32 %v1045, %v1045
        %v1087 = vmul.f32 %v1046, %v1046
        %v1088 = vmul.f32 %v1047, %v1047
        %v1089 = vsel %vm649, %v1081, 0.0
        %v1090 = vsel %vm649, %v1082, 0.0
        %v1091 = vadd.f32 %v1089, %v1090
        %v1092 = vsel %vm649, %v1083, 0.0
        %v1093 = vadd.f32 %v1091, %v1092
        %v1094 = vsel %vm649, %v1084, 0.0
        %v1095 = vadd.f32 %v1093, %v1094
        %v1096 = vsel %vm649, %v1085, 0.0
        %v1097 = vadd.f32 %v1095, %v1096
        %v1098 = vsel %vm649, %v1086, 0.0
        %v1099 = vadd.f32 %v1097, %v1098
        %v1100 = vsel %vm649, %v1087, 0.0
        %v1101 = vadd.f32 %v1099, %v1100
        %v1102 = vsel %vm649, %v1088, 0.0
        %v1103 = vadd.f32 %v1101, %v1102
        %1104 = vadd.xlane.f32.xlu0 %v1103
        %v1105 = vpop.xlane.xlu0 %1104
        %v1106 = vrot.slane %v1105, 4
        %v1107 = vadd.f32 %v1105, %v1106
        %v1108 = vrot.slane %v1107, 2
        %v1109 = vadd.f32 %v1107, %v1108
        %v1110 = vrot.slane %v1109, 1
        %v1111 = vadd.f32 %v1109, %v1110
        %s1112 = vtos %v1111
        %v1113 = vrcp.pop 2048.0
        %v1114 = vmul.f32 2048.0, %v1113
        %v1115 = vsub.f32 1.0, %v1114
        %v1116 = vmul.f32 %v1113, %v1115
        %v1117 = vadd.f32 %v1113, %v1116
        %vm1118 = vweird.f32 %v1113
        %v1119 = vsel %vm1118, %v1113, %v1117
        %s1120 = vtos %v1119
        %s1121 = smul.f32 %s1112, %s1120
        %s1122 = smul.f32 %s1080, %s1080
        %s1123 = ssub.f32 %s1121, %s1122
        %v1124 = vstv %s1080
        %v1125 = vsub.f32 %v1040, %v1124
        %v1126 = vsub.f32 %v1041, %v1124
        %v1127 = vsub.f32 %v1042, %v1124
        %v1128 = vsub.f32 %v1043, %v1124
        %v1129 = vsub.f32 %v1044, %v1124
        %v1130 = vsub.f32 %v1045, %v1124
        %v1131 = vsub.f32 %v1046, %v1124
        %v1132 = vsub.f32 %v1047, %v1124
        %s1133 = sadd.f32 %s1123, 1e-05
        %v1134 = vstv %s1133
        %v1135 = vrsqrt.pop %v1134
        %v1136 = vmul.f32 %v1135, %v1134
        %v1137 = vmul.f32 %v1136, %v1135
        %v1138 = vmul.f32 0.5, %v1137
        %v1139 = vsub.f32 1.5, %v1138
        %v1140 = vmul.f32 %v1135, %v1139
        %vm1141 = vweird.f32 %v1134
        %vm1142 = vweird.f32 %v1135
        %vm1143 = vmor %vm1141, %vm1142
        %v1144 = vsel %vm1143, %v1135, %v1140
        %s1145 = vtos %v1144
        %v1146 = vstv %s1145
        %v1147 = vmul.f32 %v1125, %v1146
        %v1148 = vmul.f32 %v1126, %v1146
        %v1149 = vmul.f32 %v1127, %v1146
        %v1150 = vmul.f32 %v1128, %v1146
        %v1151 = vmul.f32 %v1129, %v1146
        %v1152 = vmul.f32 %v1130, %v1146
        %v1153 = vmul.f32 %v1131, %v1146
        %v1154 = vmul.f32 %v1132, %v1146
        %v1155 = vld [vmem:[%s7] sm:$0xff]
        %v1156 = vld [vmem:[%s7 + $0x8] sm:$0xff]
        %v1157 = vld [vmem:[%s7 + $0x10] sm:$0xff]
        %v1158 = vld [vmem:[%s7 + $0x18] sm:$0xff]
        %v1159 = vld [vmem:[%s7 + $0x20] sm:$0xff]
        %v1160 = vld [vmem:[%s7 + $0x28] sm:$0xff]
        %v1161 = vld [vmem:[%s7 + $0x30] sm:$0xff]
        %v1162 = vld [vmem:[%s7 + $0x38] sm:$0xff]
        %v1163 = vmul.f32 %v1147, %v1155
        %v1164 = vmul.f32 %v1148, %v1156
        %v1165 = vmul.f32 %v1149, %v1157
        %v1166 = vmul.f32 %v1150, %v1158
        %v1167 = vmul.f32 %v1151, %v1159
        %v1168 = vmul.f32 %v1152, %v1160
        %v1169 = vmul.f32 %v1153, %v1161
        %v1170 = vmul.f32 %v1154, %v1162
        %v1171 = vld [vmem:[%s8] sm:$0xff]
        %v1172 = vld [vmem:[%s8 + $0x8] sm:$0xff]
        %v1173 = vld [vmem:[%s8 + $0x10] sm:$0xff]
        %v1174 = vld [vmem:[%s8 + $0x18] sm:$0xff]
        %v1175 = vld [vmem:[%s8 + $0x20] sm:$0xff]
        %v1176 = vld [vmem:[%s8 + $0x28] sm:$0xff]
        %v1177 = vld [vmem:[%s8 + $0x30] sm:$0xff]
        %v1178 = vld [vmem:[%s8 + $0x38] sm:$0xff]
        %v1179 = vadd.f32 %v1163, %v1171
        %v1180 = vadd.f32 %v1164, %v1172
        %v1181 = vadd.f32 %v1165, %v1173
        %v1182 = vadd.f32 %v1166, %v1174
        %v1183 = vadd.f32 %v1167, %v1175
        %v1184 = vadd.f32 %v1168, %v1176
        %v1185 = vadd.f32 %v1169, %v1177
        %v1186 = vadd.f32 %v1170, %v1178
        %1187 = vst.msk [vmem:[%s325] sm:$0xff] %vm649, %v1179
        %1188 = vst.msk [vmem:[%s325 + $0x8] sm:$0xff] %vm649, %v1180
        %1189 = vst.msk [vmem:[%s325 + $0x10] sm:$0xff] %vm649, %v1181
        %1190 = vst.msk [vmem:[%s325 + $0x18] sm:$0xff] %vm649, %v1182
        %1191 = vst.msk [vmem:[%s325 + $0x20] sm:$0xff] %vm649, %v1183
        %1192 = vst.msk [vmem:[%s325 + $0x28] sm:$0xff] %vm649, %v1184
        %1193 = vst.msk [vmem:[%s325 + $0x30] sm:$0xff] %vm649, %v1185
        %1194 = vst.msk [vmem:[%s325 + $0x38] sm:$0xff] %vm649, %v1186
        %s1195 = sand.u32 %s225, 1
        %s1196 = scalar_lea.sflag [#allocation3], %s1195
        %s1197 = sand.u32 %s225, 1
        %s1198 = smul.addr %s1197, 64
        %s1199 = scalar_lea.vmem [#allocation2], %s1198
        // Predicated region
        $region57: #{sc_forward.1} parent=55 // pred_check
          %p1200 = pneg %p235
        $region58: #{sc_forward.1} parent=55 // pred_check_branch
          %1202 = sbr.rel (%p1200) target = $region60
        $region59: #{sc_forward.1} parent=55 // pred_region
          %1204 = vsyncadd %s1196, 0
          %s1205 = smul.addr %s23, 8
          %s1206 = smul.addr %s1205, 8
          %s1207 = scalar_lea.hbm %s9, %s1206
          %s1208 = sshll.u32 %s1199, 4
          %s1209 = int_to_ptr.vmem [resolvable:$true] %s1208
          %s1210 = sshll.u32 %s1207, 4
          %s1211 = int_to_ptr.hbm [resolvable:$true] %s1210
          %1216 = dma.vmem_to_hbm [thread:$0]  %s1209, 1024, %s1211, %s1196, 128, 128, 8
        $region60: #{sc_forward.1} parent=55 // pred_fallthru
          _
      $region56: #{sc_forward.1} parent=5 // pred_fallthru
        _
      %p1217 = scmp.le.s32.totalorder 2, %s18
      // Predicated region
      $region61: #{sc_forward.1} parent=5 // pred_check
        %p1218 = pneg %p1217
      $region62: #{sc_forward.1} parent=5 // pred_check_branch
        %1220 = sbr.rel (%p1218) target = $region64
      $region63: #{sc_forward.1} parent=5 // pred_region
        %s1221 = ssub.s32 %s18, 2
        // Predicated region
        $region65: #{sc_forward.1} parent=63 // pred_check
          %p1222 = pneg %p241
        $region66: #{sc_forward.1} parent=63 // pred_check_branch
          %1224 = sbr.rel (%p1222) target = $region68
        $region67: #{sc_forward.1} parent=63 // pred_region
          %s1225 = sand.u32 %s226, 1
          %s1226 = scalar_lea.sflag [#allocation3], %s1225
          %s1227 = sand.u32 %s226, 1
          %s1228 = smul.addr %s1227, 64
          %s1229 = scalar_lea.vmem [#allocation2], %s1228
          %1231 = dma.done %s1226, 1024
        $region68: #{sc_forward.1} parent=63 // pred_fallthru
          _
      $region64: #{sc_forward.1} parent=5 // pred_fallthru
        _
    $region6: #{sc_forward.1} parent=1 // loop_footer
      %s22 = sadd.s32 1, %s18
    $region7: #{sc_forward.1} parent=1 // loop_footer_branch
      %17 = sbr.rel target = $region3
    $region8: #{sc_forward.1} parent=1 // loop_exit
      _
    %1232 = vsyncpa [#allocation3], 1
    %s1233 = scalar_lea.sflag [#allocation3], 1
    %1234 = vsyncpa %s1233, 1

</llo_original>
